<compile_context>
chip_gen: v7x
topology: tpu7x:2x2x1
jax: 0.10.0
libtpu: 0.0.40
codegen_flags: <defaults>
</compile_context>

<pallas_src>
import jax
import jax.numpy as jnp
from jax.experimental import pallas as pl
from jax.experimental.pallas import tpu as pltpu

LANE = 128


def mlp_kernel(x_ref, w1_ref, b1_ref, w2_ref, b2_ref, o_ref):
    # fc1 + ReLU (bias add / ReLU ride free VPU slots next to the MXU work)
    h = jnp.dot(x_ref[...], w1_ref[...], preferred_element_type=jnp.float32)
    h = jnp.maximum(h + b1_ref[...], 0.0)          # b1 is (1, hidden), broadcasts
    # fc2 into a lane-padded (TB, 128) output block -> dense stores
    q = jnp.dot(h, w2_ref[...], preferred_element_type=jnp.float32)
    o_ref[...] = (q + b2_ref[...]).astype(o_ref.dtype)


def _round_up(x, m):
    return (x + m - 1) // m * m


def network_forward(state, w1, b1, w2, b2, *, batch_tile=512):
    """Q-network forward: relu(state @ w1 + b1) @ w2 + b2.

    state: (B, input_size) f32
    w1:    (input_size, 30) f32   b1: (1, 30) f32
    w2:    (30, nb_action) f32    b2: (1, nb_action) f32
    returns: (B, nb_action) f32
    """
    B, input_size = state.shape
    hidden, nb_action = w2.shape

    # --- lane-pad the output head to a multiple of 128 (dense vst) ----------
    n_pad = _round_up(max(nb_action, 1), LANE)
    w2p = jnp.zeros((hidden, n_pad), w2.dtype).at[:, :nb_action].set(w2)
    b2p = jnp.zeros((1, n_pad), b2.dtype).at[:, :nb_action].set(b2)

    # --- pick a batch tile (multiple of 8 sublanes) and pad B to it ---------
    TB = min(batch_tile, _round_up(B, 8))
    Bp = _round_up(B, TB)
    if Bp != B:
        state_p = jnp.zeros((Bp, input_size), state.dtype).at[:B].set(state)
    else:
        state_p = state

    grid = (Bp // TB,)
    out = pl.pallas_call(
        mlp_kernel,
        out_shape=jax.ShapeDtypeStruct((Bp, n_pad), jnp.float32),
        grid=grid,
        in_specs=[
            # batch-tiled activations
            pl.BlockSpec((TB, input_size), lambda i: (i, 0)),
            # weights / biases: constant block index -> VMEM-resident across tiles
            pl.BlockSpec((input_size, hidden), lambda i: (0, 0)),
            pl.BlockSpec((1, hidden), lambda i: (0, 0)),
            pl.BlockSpec((hidden, n_pad), lambda i: (0, 0)),
            pl.BlockSpec((1, n_pad), lambda i: (0, 0)),
        ],
        out_specs=pl.BlockSpec((TB, n_pad), lambda i: (i, 0)),
        compiler_params=pltpu.CompilerParams(
            dimension_semantics=("parallel",),   # use both TCs on v7x
        ),
    )(state_p, w1, b1, w2p, b2p)

    return out[:B, :nb_action]


def init_linear_params(key, in_features, out_features):
    """Deterministic init mirroring torch.nn.Linear default (U[-1/sqrt(fan_in), 1/sqrt(fan_in)])."""
    kw, kb = jax.random.split(key)
    bound = 1.0 / (in_features ** 0.5)
    # Stored as (in_features, out_features) == transposed PyTorch weight.
    w = jax.random.uniform(kw, (in_features, out_features), jnp.float32, -bound, bound)
    b = jax.random.uniform(kb, (1, out_features), jnp.float32, -bound, bound)
    return w, b


def reference_forward(state, w1, b1, w2, b2):
    h = jnp.maximum(state @ w1 + b1, 0.0)
    return h @ w2 + b2


if __name__ == "__main__":
    input_size = 5     # e.g. sensor inputs
    nb_action = 3
    hidden = 30        # fixed by the module definition (fc1 -> 30)
    batch = 2

    key = jax.random.PRNGKey(0)
    k_state, k_fc1, k_fc2, k_big = jax.random.split(key, 4)

    state = jax.random.normal(k_state, (batch, input_size), jnp.float32)
    w1, b1 = init_linear_params(k_fc1, input_size, hidden)
    w2, b2 = init_linear_params(k_fc2, hidden, nb_action)

    # Small-batch path (single grid step, padded sublanes/lanes)
    q_values = network_forward(state, w1, b1, w2, b2)
    q_values = jax.block_until_ready(q_values)
    ref = reference_forward(state, w1, b1, w2, b2)
    assert q_values.shape == (batch, nb_action)
    assert jnp.allclose(q_values, ref, atol=1e-5, rtol=1e-5), "mismatch vs reference (B=2)"

    # Batched path (multiple grid steps + batch padding), the regime where the
    # tiled kernel actually pays off.
    big_batch = 1037
    big_state = jax.random.normal(k_big, (big_batch, input_size), jnp.float32)
    q_big = network_forward(big_state, w1, b1, w2, b2)
    q_big = jax.block_until_ready(q_big)
    ref_big = reference_forward(big_state, w1, b1, w2, b2)
    assert q_big.shape == (big_batch, nb_action)
    assert jnp.allclose(q_big, ref_big, atol=1e-4, rtol=1e-5), "mismatch vs reference (B=1037)"

    print("KERNEL_OK")
</pallas_src>

<mosaic_0001>
module attributes {stable_mosaic.version = 11 : i64} {
  func.func @mlp_kernel(%arg0: i32, %arg1: memref<8x5xf32, #tpu.memory_space<vmem>>, %arg2: memref<5x30xf32, #tpu.memory_space<vmem>>, %arg3: memref<1x30xf32, #tpu.memory_space<vmem>>, %arg4: memref<30x128xf32, #tpu.memory_space<vmem>>, %arg5: memref<1x128xf32, #tpu.memory_space<vmem>>, %arg6: memref<8x128xf32, #tpu.memory_space<vmem>>) attributes {dimension_semantics = [#tpu.dimension_semantics<parallel>], iteration_bounds = array<i64: 1>, scalar_prefetch = 0 : i64, scratch_operands = 0 : i64, tpu.core_type = #tpu.core_type<tc>, window_params = [{transform_indices = @transform_0, window_bounds = array<i64: 8, 5>}, {pipeline_mode = #tpu.pipeline_mode<synchronous>, transform_indices = @transform_1, window_bounds = array<i64: 5, 30>}, {pipeline_mode = #tpu.pipeline_mode<synchronous>, transform_indices = @transform_2, window_bounds = array<i64: 1, 30>}, {pipeline_mode = #tpu.pipeline_mode<synchronous>, transform_indices = @transform_3, window_bounds = array<i64: 30, 128>}, {pipeline_mode = #tpu.pipeline_mode<synchronous>, transform_indices = @transform_4, window_bounds = array<i64: 1, 128>}, {transform_indices = @transform_5, window_bounds = array<i64: 8, 128>}]} {
    %c0 = arith.constant 0 : index
    %c0_0 = arith.constant 0 : index
    %0 = vector.load %arg1[%c0, %c0_0] : memref<8x5xf32, #tpu.memory_space<vmem>>, vector<8x5xf32>
    %c0_1 = arith.constant 0 : index
    %c0_2 = arith.constant 0 : index
    %1 = vector.load %arg2[%c0_1, %c0_2] : memref<5x30xf32, #tpu.memory_space<vmem>>, vector<5x30xf32>
    %cst = arith.constant dense<0.000000e+00> : vector<8x30xf32>
    %2 = tpu.matmul %0, %1, %cst {dimension_numbers = #tpu.dot_dimension_numbers<[1], [0], [0], [1], [0, 0, 1, 1], [], []>} : vector<8x5xf32>, vector<5x30xf32>, vector<8x30xf32> -> vector<8x30xf32>
    %c0_3 = arith.constant 0 : index
    %c0_4 = arith.constant 0 : index
    %3 = vector.load %arg3[%c0_3, %c0_4] : memref<1x30xf32, #tpu.memory_space<vmem>>, vector<1x30xf32>
    %4 = vector.broadcast %3 : vector<1x30xf32> to vector<8x30xf32>
    %5 = arith.addf %2, %4 : vector<8x30xf32>
    %cst_5 = arith.constant 0.000000e+00 : f32
    %6 = vector.broadcast %cst_5 : f32 to vector<8x30xf32>
    %7 = arith.maximumf %5, %6 : vector<8x30xf32>
    %c0_6 = arith.constant 0 : index
    %c0_7 = arith.constant 0 : index
    %8 = vector.load %arg4[%c0_6, %c0_7] : memref<30x128xf32, #tpu.memory_space<vmem>>, vector<30x128xf32>
    %cst_8 = arith.constant dense<0.000000e+00> : vector<8x128xf32>
    %9 = tpu.matmul %7, %8, %cst_8 {dimension_numbers = #tpu.dot_dimension_numbers<[1], [0], [0], [1], [0, 0, 1, 1], [], []>} : vector<8x30xf32>, vector<30x128xf32>, vector<8x128xf32> -> vector<8x128xf32>
    %c0_9 = arith.constant 0 : index
    %c0_10 = arith.constant 0 : index
    %10 = vector.load %arg5[%c0_9, %c0_10] : memref<1x128xf32, #tpu.memory_space<vmem>>, vector<1x128xf32>
    %11 = vector.broadcast %10 : vector<1x128xf32> to vector<8x128xf32>
    %12 = arith.addf %9, %11 : vector<8x128xf32>
    %c0_11 = arith.constant 0 : index
    %c0_12 = arith.constant 0 : index
    %13 = vector.load %arg6[%c0_11, %c0_12] : memref<8x128xf32, #tpu.memory_space<vmem>>, vector<8x128xf32>
    tpu.vector_store %arg6[%c0_11, %c0_12], %12 {strides = array<i32>} : memref<8x128xf32, #tpu.memory_space<vmem>>, vector<8x128xf32>,
    return
  }
  func.func @transform_0(%arg0: i32) -> (i32, i32) {
    %c0_i32 = arith.constant 0 : i32
    %c0_i32_0 = arith.constant 0 : i32
    return %arg0, %c0_i32 : i32, i32
  }
  func.func @transform_1(%arg0: i32) -> (i32, i32) {
    %c0_i32 = arith.constant 0 : i32
    %c0_i32_0 = arith.constant 0 : i32
    %c0_i32_1 = arith.constant 0 : i32
    return %c0_i32, %c0_i32_0 : i32, i32
  }
  func.func @transform_2(%arg0: i32) -> (i32, i32) {
    %c0_i32 = arith.constant 0 : i32
    %c0_i32_0 = arith.constant 0 : i32
    %c0_i32_1 = arith.constant 0 : i32
    return %c0_i32, %c0_i32_0 : i32, i32
  }
  func.func @transform_3(%arg0: i32) -> (i32, i32) {
    %c0_i32 = arith.constant 0 : i32
    %c0_i32_0 = arith.constant 0 : i32
    %c0_i32_1 = arith.constant 0 : i32
    return %c0_i32, %c0_i32_0 : i32, i32
  }
  func.func @transform_4(%arg0: i32) -> (i32, i32) {
    %c0_i32 = arith.constant 0 : i32
    %c0_i32_0 = arith.constant 0 : i32
    %c0_i32_1 = arith.constant 0 : i32
    return %c0_i32, %c0_i32_0 : i32, i32
  }
  func.func @transform_5(%arg0: i32) -> (i32, i32) {
    %c0_i32 = arith.constant 0 : i32
    %c0_i32_0 = arith.constant 0 : i32
    return %arg0, %c0_i32 : i32, i32
  }
}

</mosaic_0001>

<llo_original>
// kernel: tpu_custom_call.1
$region0: #{tpu_custom_call.1}
  #allocation0 [shape = 'u32[]', space=smem, size = 0x4, offset = 0x4, fixed_abs, tag = 'smem constant byte address 0x4 - core index']
  #allocation1 [shape = 'u32[144,128]{1,0:T(1,128)}', space=vmem, size = 0x12000, scoped, tag = 'internal scratch']
  %s0 = inlined_call_operand.hbm [shape: f32[8,5], index: 0, kind: input, shape index: {}]
  %s1 = inlined_call_operand.hbm [shape: f32[5,30], index: 1, kind: input, shape index: {}]
  %s2 = inlined_call_operand.vmem [shape: f32[1,30], index: 2, kind: input, shape index: {}]
  %s3 = inlined_call_operand.hbm [shape: f32[30,128], index: 3, kind: input, shape index: {}]
  %s4 = inlined_call_operand.vmem [shape: f32[1,128], index: 4, kind: input, shape index: {}]
  %s5 = inlined_call_operand.hbm [shape: f32[8,128], index: 5, kind: output, shape index: {}]
  %s6 = sld [smem:[#allocation0]]
  $region42: #{tpu_custom_call.1} parent=0
    _
  %s8 = ssub.s32 1, %s6
  %s9 = scalar_select 0, %s8, %s6
  $region1: #{tpu_custom_call.1} parent=0
    #allocation2 [shape = 'u8[4096]{0}', space=vmem, size = 0x1000, scoped, tag = 'input window, operand 0, single buffered']
    #allocation3 [shape = 's32[1]{0}', space=sflag, size = 0x4, scoped, tag = 'scoped memory for tpu_custom_call.1']
    #allocation4 [shape = 's32[1]{0}', space=sflag, size = 0x4, scoped, tag = 'scoped memory for tpu_custom_call.1']
    #allocation5 [shape = 'u8[4096]{0}', space=vmem, size = 0x1000, scoped, tag = 'input window, operand 1, single buffered']
    #allocation6 [shape = 's32[1]{0}', space=sflag, size = 0x4, scoped, tag = 'scoped memory for tpu_custom_call.1']
    #allocation7 [shape = 'u8[16384]{0}', space=vmem, size = 0x4000, scoped, tag = 'input window, operand 3, single buffered']
    #allocation8 [shape = 'u8[4096]{0}', space=vmem, size = 0x1000, scoped, tag = 'output window, operand 0, single buffered']
    %10 = vsyncpa [#allocation3], 0
    %11 = vsyncpa [#allocation6], 0
    %12 = vsyncpa [#allocation4], 0
    // Predicated region
    $region2: #{tpu_custom_call.1} parent=1 // pred_check
      _
    $region3: #{tpu_custom_call.1} parent=1 // pred_check_branch
      %14 = sbr.rel (0) target = $region5
    $region4: #{tpu_custom_call.1} parent=1 // pred_region
      %s16 = ssub.s32 128, 128
      %17 = vsyncadd [#allocation3], %s16
      %s19 = sshll.u32 [#allocation2], 4
      %s20 = int_to_ptr.vmem [resolvable:$true] %s19
      %22 = dma.hbm_to_vmem [thread:$0]  %s0, 128, %s20, [#allocation3]
    $region5: #{tpu_custom_call.1} parent=1 // pred_fallthru
      _
    // Predicated region
    $region6: #{tpu_custom_call.1} parent=1 // pred_check
      _
    $region7: #{tpu_custom_call.1} parent=1 // pred_check_branch
      %24 = sbr.rel (0) target = $region9
    $region8: #{tpu_custom_call.1} parent=1 // pred_region
      %s26 = ssub.s32 128, 128
      %27 = vsyncadd [#allocation6], %s26
      %s29 = sshll.u32 [#allocation5], 4
      %s30 = int_to_ptr.vmem [resolvable:$true] %s29
      %32 = dma.hbm_to_vmem [thread:$0]  %s1, 128, %s30, [#allocation6]
    $region9: #{tpu_custom_call.1} parent=1 // pred_fallthru
      _
    // Predicated region
    $region10: #{tpu_custom_call.1} parent=1 // pred_check
      _
    $region11: #{tpu_custom_call.1} parent=1 // pred_check_branch
      %34 = sbr.rel (0) target = $region13
    $region12: #{tpu_custom_call.1} parent=1 // pred_region
      _
    $region13: #{tpu_custom_call.1} parent=1 // pred_fallthru
      _
    // Predicated region
    $region14: #{tpu_custom_call.1} parent=1 // pred_check
      _
    $region15: #{tpu_custom_call.1} parent=1 // pred_check_branch
      %36 = sbr.rel (0) target = $region17
    $region16: #{tpu_custom_call.1} parent=1 // pred_region
      %s38 = ssub.s32 512, 512
      %39 = vsyncadd [#allocation6], %s38
      %s40 = sshll.u32 [#allocation7], 4
      %s41 = int_to_ptr.vmem [resolvable:$true] %s40
      %46 = dma.hbm_to_vmem [thread:$0]  %s3, 512, %s41, [#allocation6], 128, 128, 8
    $region17: #{tpu_custom_call.1} parent=1 // pred_fallthru
      _
    // Predicated region
    $region18: #{tpu_custom_call.1} parent=1 // pred_check
      _
    $region19: #{tpu_custom_call.1} parent=1 // pred_check_branch
      %48 = sbr.rel (0) target = $region21
    $region20: #{tpu_custom_call.1} parent=1 // pred_region
      _
    $region21: #{tpu_custom_call.1} parent=1 // pred_fallthru
      _
    // Predicated region
    $region22: #{tpu_custom_call.1} parent=1 // pred_check
      _
    $region23: #{tpu_custom_call.1} parent=1 // pred_check_branch
      %50 = sbr.rel (0) target = $region25
    $region24: #{tpu_custom_call.1} parent=1 // pred_region
      %51 = dma.done [#allocation3], 128
    $region25: #{tpu_custom_call.1} parent=1 // pred_fallthru
      _
    // Predicated region
    $region26: #{tpu_custom_call.1} parent=1 // pred_check
      _
    $region27: #{tpu_custom_call.1} parent=1 // pred_check_branch
      %53 = sbr.rel (0) target = $region29
    $region28: #{tpu_custom_call.1} parent=1 // pred_region
      %54 = dma.done [#allocation6], 128
    $region29: #{tpu_custom_call.1} parent=1 // pred_fallthru
      _
    // Predicated region
    $region30: #{tpu_custom_call.1} parent=1 // pred_check
      _
    $region31: #{tpu_custom_call.1} parent=1 // pred_check_branch
      %56 = sbr.rel (0) target = $region33
    $region32: #{tpu_custom_call.1} parent=1 // pred_region
      %57 = dma.done [#allocation6], 512
    $region33: #{tpu_custom_call.1} parent=1 // pred_fallthru
      _
    %v58 = vld [vmem:[#allocation2] sm:$0xff]
    %v59 = vld [vmem:[#allocation5] sm:$0x1f]
    %v60 = vld [vmem:[%s2] sm:$0x1]
    %v62 = vlaneseq
    %v63 = vshrl.u32 %v62, 7
    %v64 = vsub.s32 0, %v63
    %v65 = vrot.slane %v60, %v64
    %vm67 = vcmask 39936
    %v69 = vsel %vm67, %v58, 0
    %vm71 = vcmask 1044480
    %v73 = vsel %vm71, %v59, 0
    %75 = vmatprep.subr.mxu0 0.0
    %76 = vmatpush1.msra.mxu0 %v73
    %77 = vmatprep.subr.mxu0 0.0
    %78 = vmatpush1.msra.mxu0 0.0
    %79 = vmatprep.subr.mxu0 0.0
    %80 = vmatpush1.msra.mxu0 0.0
    %81 = vmatprep.subr.mxu0 0.0
    %82 = vmatpush1.msra.mxu0 0.0
    %83 = vmatprep.subr.mxu0 0.0
    %84 = vmatpush1.msra.mxu0 0.0
    %85 = vmatprep.subr.mxu0 0.0
    %86 = vmatpush1.msra.mxu0 0.0
    %87 = vmatprep.subr.mxu0 0.0
    %88 = vmatpush1.msra.mxu0 0.0
    %89 = vmatprep.subr.mxu0 0.0
    %90 = vmatpush1.msra.mxu0 0.0
    %91 = vmatprep.subr.mxu0 0.0
    %92 = vmatpush1.msra.mxu0 0.0
    %93 = vmatprep.subr.mxu0 0.0
    %94 = vmatpush1.msra.mxu0 0.0
    %95 = vmatprep.subr.mxu0 0.0
    %96 = vmatpush1.msra.mxu0 0.0
    %97 = vmatprep.subr.mxu0 0.0
    %98 = vmatpush1.msra.mxu0 0.0
    %99 = vmatprep.subr.mxu0 0.0
    %100 = vmatpush1.msra.mxu0 0.0
    %101 = vmatprep.subr.mxu0 0.0
    %102 = vmatpush1.msra.mxu0 0.0
    %103 = vmatprep.subr.mxu0 0.0
    %104 = vmatpush1.msra.mxu0 0.0
    %105 = vmatprep.subr.mxu0 0.0
    %106 = vmatpush1.msra.mxu0 0.0
    %107 = vmatprep.subr.mxu0 0.0
    %108 = vmatpush1.msra.mxu0 0.0
    %109 = vmatprep.subr.mxu0 0.0
    %110 = vmatpush1.msra.mxu0 0.0
    %111 = vmatprep.subr.mxu0 0.0
    %112 = vmatpush1.msra.mxu0 0.0
    %113 = vmatprep.subr.mxu0 0.0
    %114 = vmatpush1.msra.mxu0 0.0
    %115 = vmatprep.subr.mxu0 0.0
    %116 = vmatpush1.msra.mxu0 0.0
    %117 = vmatprep.subr.mxu0 0.0
    %118 = vmatpush1.msra.mxu0 0.0
    %119 = vmatprep.subr.mxu0 0.0
    %120 = vmatpush1.msra.mxu0 0.0
    %121 = vmatprep.subr.mxu0 0.0
    %122 = vmatpush1.msra.mxu0 0.0
    %123 = vmatprep.subr.mxu0 0.0
    %124 = vmatpush1.msra.mxu0 0.0
    %125 = vmatprep.subr.mxu0 0.0
    %126 = vmatpush1.msra.mxu0 0.0
    %127 = vmatprep.subr.mxu0 0.0
    %128 = vmatpush1.msra.mxu0 0.0
    %129 = vmatprep.subr.mxu0 0.0
    %130 = vmatpush1.msra.mxu0 0.0
    %131 = vmatprep.subr.mxu0 0.0
    %132 = vmatpush1.msra.mxu0 0.0
    %133 = vmatprep.subr.mxu0 0.0
    %134 = vmatpush1.msra.mxu0 0.0
    %135 = vmatprep.subr.mxu0 0.0
    %136 = vmatpush1.msra.mxu0 0.0
    %137 = vmatprep.subr.mxu0 0.0
    %138 = vmatpush1.msra.mxu0 0.0
    %139 = vmatprep.mubr.f32.mxu0 0.0
    %140 = vmatmul.mubr.f32.gmra.mrb[0].mxu0 %v69
    %v141 = vpop.f32.mrb[0].mxu0
    %v142 = vadd.f32 %v65, %v141
    %v143 = vpop.f32.mrb[0].mxu0
    %144 = vdwg.mxu0
    %v145 = vmax.f32 %v142, 0.0
    %v146 = vld [vmem:[#allocation7] sm:$0xff]
    %v147 = vld [vmem:[#allocation7 + $0x8] sm:$0xff]
    %v148 = vld [vmem:[#allocation7 + $0x10] sm:$0xff]
    %v149 = vld [vmem:[#allocation7 + $0x18] sm:$0x3f]
    %v150 = vld [vmem:[%s4] sm:$0x1]
    %v152 = vlaneseq
    %v153 = vshrl.u32 %v152, 7
    %v154 = vsub.s32 0, %v153
    %v155 = vrot.slane %v150, %v154
    %vm157 = vcmask 244736
    %v159 = vsel %vm157, %v145, 0
    %vm161 = vcmask 1045504
    %v163 = vsel %vm161, %v149, 0
    %165 = vmatprep.subr.mxu0 0.0
    %166 = vmatpush1.msra.mxu0 %v146
    %167 = vmatprep.subr.mxu0 0.0
    %168 = vmatpush1.msra.mxu0 %v147
    %169 = vmatprep.subr.mxu0 0.0
    %170 = vmatpush1.msra.mxu0 %v148
    %171 = vmatprep.subr.mxu0 0.0
    %172 = vmatpush1.msra.mxu0 %v163
    %173 = vmatprep.subr.mxu0 0.0
    %174 = vmatpush1.msra.mxu0 0.0
    %175 = vmatprep.subr.mxu0 0.0
    %176 = vmatpush1.msra.mxu0 0.0
    %177 = vmatprep.subr.mxu0 0.0
    %178 = vmatpush1.msra.mxu0 0.0
    %179 = vmatprep.subr.mxu0 0.0
    %180 = vmatpush1.msra.mxu0 0.0
    %181 = vmatprep.subr.mxu0 0.0
    %182 = vmatpush1.msra.mxu0 0.0
    %183 = vmatprep.subr.mxu0 0.0
    %184 = vmatpush1.msra.mxu0 0.0
    %185 = vmatprep.subr.mxu0 0.0
    %186 = vmatpush1.msra.mxu0 0.0
    %187 = vmatprep.subr.mxu0 0.0
    %188 = vmatpush1.msra.mxu0 0.0
    %189 = vmatprep.subr.mxu0 0.0
    %190 = vmatpush1.msra.mxu0 0.0
    %191 = vmatprep.subr.mxu0 0.0
    %192 = vmatpush1.msra.mxu0 0.0
    %193 = vmatprep.subr.mxu0 0.0
    %194 = vmatpush1.msra.mxu0 0.0
    %195 = vmatprep.subr.mxu0 0.0
    %196 = vmatpush1.msra.mxu0 0.0
    %197 = vmatprep.subr.mxu0 0.0
    %198 = vmatpush1.msra.mxu0 0.0
    %199 = vmatprep.subr.mxu0 0.0
    %200 = vmatpush1.msra.mxu0 0.0
    %201 = vmatprep.subr.mxu0 0.0
    %202 = vmatpush1.msra.mxu0 0.0
    %203 = vmatprep.subr.mxu0 0.0
    %204 = vmatpush1.msra.mxu0 0.0
    %205 = vmatprep.subr.mxu0 0.0
    %206 = vmatpush1.msra.mxu0 0.0
    %207 = vmatprep.subr.mxu0 0.0
    %208 = vmatpush1.msra.mxu0 0.0
    %209 = vmatprep.subr.mxu0 0.0
    %210 = vmatpush1.msra.mxu0 0.0
    %211 = vmatprep.subr.mxu0 0.0
    %212 = vmatpush1.msra.mxu0 0.0
    %213 = vmatprep.subr.mxu0 0.0
    %214 = vmatpush1.msra.mxu0 0.0
    %215 = vmatprep.subr.mxu0 0.0
    %216 = vmatpush1.msra.mxu0 0.0
    %217 = vmatprep.subr.mxu0 0.0
    %218 = vmatpush1.msra.mxu0 0.0
    %219 = vmatprep.subr.mxu0 0.0
    %220 = vmatpush1.msra.mxu0 0.0
    %221 = vmatprep.subr.mxu0 0.0
    %222 = vmatpush1.msra.mxu0 0.0
    %223 = vmatprep.subr.mxu0 0.0
    %224 = vmatpush1.msra.mxu0 0.0
    %225 = vmatprep.subr.mxu0 0.0
    %226 = vmatpush1.msra.mxu0 0.0
    %227 = vmatprep.subr.mxu0 0.0
    %228 = vmatpush1.msra.mxu0 0.0
    %229 = vmatprep.mubr.f32.mxu0 0.0
    %230 = vmatmul.mubr.f32.gmra.mrb[0].mxu0 %v159
    %v231 = vpop.f32.mrb[0].mxu0
    %v232 = vadd.f32 %v155, %v231
    %v233 = vpop.f32.mrb[0].mxu0
    %234 = vdwg.mxu0
    %235 = vst [vmem:[#allocation8] sm:$0xff] %v232
    // Predicated region
    $region34: #{tpu_custom_call.1} parent=1 // pred_check
      _
    $region35: #{tpu_custom_call.1} parent=1 // pred_check_branch
      %237 = sbr.rel (0) target = $region37
    $region36: #{tpu_custom_call.1} parent=1 // pred_region
      %s239 = ssub.s32 128, 128
      %240 = vsyncadd [#allocation4], %s239
      %s242 = sshll.u32 [#allocation8], 4
      %s243 = int_to_ptr.vmem [resolvable:$true] %s242
      %245 = dma.vmem_to_hbm [thread:$0]  %s243, 128, %s5, [#allocation4]
    $region37: #{tpu_custom_call.1} parent=1 // pred_fallthru
      _
    // Predicated region
    $region38: #{tpu_custom_call.1} parent=1 // pred_check
      _
    $region39: #{tpu_custom_call.1} parent=1 // pred_check_branch
      %247 = sbr.rel (0) target = $region41
    $region40: #{tpu_custom_call.1} parent=1 // pred_region
      %248 = dma.done [#allocation4], 128
    $region41: #{tpu_custom_call.1} parent=1 // pred_fallthru
      _
    %249 = vsyncpa [#allocation3], 1
    %250 = vsyncpa [#allocation6], 1
    %251 = vsyncpa [#allocation4], 1

</llo_original>
